<compile_context>
chip_gen: v7x
topology: tpu7x:2x2x1
jax: 0.10.0
libtpu: 0.0.40
codegen_flags: <defaults>
</compile_context>

<pallas_src>
import functools

import jax
import jax.numpy as jnp
from jax import lax
from jax.experimental import pallas as pl
from jax.experimental.pallas import tpu as pltpu


# ---------------------------------------------------------------------------
# Pallas kernel: fused sampler matmul + fuzzy-NAND aggregator + residual
# ---------------------------------------------------------------------------
def _make_sampler_kernel(residual: bool):
    def kernel(x_ref, w_ref, o_ref):
        # x tile: [tb, N_IN] bf16 ; fused weight: [N_IN, 2*N_OUT_P] bf16
        x_bf = x_ref[...]
        s = jnp.dot(x_bf, w_ref[...],
                    preferred_element_type=jnp.float32)   # [tb, 2*N_OUT_P] f32
        n_out_p = o_ref.shape[-1]
        s0 = s[:, :n_out_p]                                # degree-0 samples
        s1 = s[:, n_out_p:]                                # degree-1 samples
        # aggregator: fuzzy NAND over the degree dimension (degree == 2)
        y = 1.0 - s0 * s1
        if residual:                                       # N_OUT == N_IN
            x_f32 = x_bf.astype(jnp.float32)
            pad = n_out_p - x_f32.shape[-1]
            if pad > 0:                                    # static, no-op here
                x_f32 = jnp.pad(x_f32, ((0, 0), (0, pad)))
            y = y + x_f32
        o_ref[...] = y.astype(o_ref.dtype)                 # single cast, bf16 store
    return kernel


def _pick_batch_tile(B: int, tb: int) -> int:
    """Pick a batch tile: big (amortize per-step overhead / weight push),
    sublane-aligned, and leaving >= 2 grid steps for v7x's two TensorCores."""
    tb = min(tb, B)
    if tb < B:
        tb = max(8, (tb // 8) * 8)          # (8,128) sublane rule for sub-full blocks
    elif B >= 16:
        # grid would collapse to 1 step -> one v7x TC would idle; split in two.
        tb = max(8, (B // 2 // 8) * 8)
    return tb


def sampler_layer_forward(x, w_cat, *, residual=True, tb=512):
    """x: [B, N_IN] bf16 activations; w_cat: [N_IN, 2*N_OUT_P] bf16 fused
    interpolation matrix (per-degree width already padded to a multiple of 128)."""
    B, n_in = x.shape
    n_out2 = w_cat.shape[1]
    n_out_p = n_out2 // 2

    tb = _pick_batch_tile(B, tb)
    n_blocks = pl.cdiv(B, tb)               # ragged last block is fine (see header)

    # VMEM budget from actual buffers (double-buffered x/out tiles + weights).
    vmem_bytes = (2 * tb * n_in * 2          # bf16 x tile, 2 buffers
                  + 2 * tb * n_out_p * 2     # bf16 out tile, 2 buffers
                  + 2 * n_in * n_out2 * 2    # bf16 fused weight, 2 buffers
                  + (2 << 20))               # internal scratch headroom
    vmem_bytes = int(min(max(vmem_bytes, 4 << 20), 48 << 20))

    flops = 2 * B * n_in * n_out2            # one fused matmul
    bytes_accessed = (B * n_in * 2           # bf16 x in
                      + n_in * n_out2 * 2    # bf16 fused weights
                      + B * n_out_p * 2)     # bf16 out

    out = pl.pallas_call(
        _make_sampler_kernel(residual),
        out_shape=jax.ShapeDtypeStruct((B, n_out_p), jnp.bfloat16),
        grid=(n_blocks,),
        in_specs=[
            pl.BlockSpec((tb, n_in), lambda i: (i, 0)),        # batch-tiled x
            pl.BlockSpec((n_in, n_out2), lambda i: (0, 0)),    # VMEM-resident W
        ],
        out_specs=pl.BlockSpec((tb, n_out_p), lambda i: (i, 0)),
        compiler_params=pltpu.CompilerParams(
            dimension_semantics=("parallel",),                 # v7x: both TCs
            vmem_limit_bytes=vmem_bytes,
        ),
        cost_estimate=pl.CostEstimate(
            flops=flops, transcendentals=0, bytes_accessed=bytes_accessed),
    )(x, w_cat)
    return out


# ---------------------------------------------------------------------------
# Glue: build dense interpolation matrices from the sampling parameters
# (this is the `init_sampling_parameters` + index-math part of the module;
#  layout/parameter plumbing, not the hot path)
# ---------------------------------------------------------------------------
def build_interp_matrices(sample_positions, n_in):
    """sample_positions: [N_OUT, degree] continuous positions in [0, n_in-1].

    Returns `degree` matrices of shape [n_in, N_OUT] such that
    (x @ W_d)[b, o] == linear-interp of x[b, :] at sample_positions[o, d].
    """
    n_out, degree = sample_positions.shape
    mats = []
    for d in range(degree):
        p = sample_positions[:, d]                               # [N_OUT]
        lo = jnp.clip(jnp.floor(p), 0, n_in - 1).astype(jnp.int32)
        hi = jnp.clip(lo + 1, 0, n_in - 1)
        frac = (p - lo.astype(jnp.float32))[:, None]             # [N_OUT, 1]
        w = ((1.0 - frac) * jax.nn.one_hot(lo, n_in, dtype=jnp.float32)
             + frac * jax.nn.one_hot(hi, n_in, dtype=jnp.float32))  # [N_OUT, N_IN]
        mats.append(w.T)                                         # [N_IN, N_OUT]
    return mats


def fuse_and_pad_weights(w0, w1):
    """Fuse the two degree matrices into one wide bf16 weight, padding each
    degree's output width up to a multiple of 128 so the in-kernel s0/s1 split
    falls exactly on a vreg lane-tile boundary (no-op when n_out % 128 == 0)."""
    n_in, n_out = w0.shape
    n_out_p = ((n_out + 127) // 128) * 128
    if n_out_p != n_out:
        pad = ((0, 0), (0, n_out_p - n_out))
        w0 = jnp.pad(w0, pad)
        w1 = jnp.pad(w1, pad)
    w_cat = jnp.concatenate([w0, w1], axis=1).astype(jnp.bfloat16)  # [N_IN, 2*N_OUT_P]
    return w_cat, n_out_p


if __name__ == "__main__":
    B = 1280       # batch (tb=512 -> 3 grid steps, ragged last block exercised)
    N_IN = 128     # input feature size
    N_OUT = 128    # output feature size (== N_IN so residual is valid)
    DEGREE = 2

    key = jax.random.PRNGKey(0)
    kx, kp = jax.random.split(key)

    # deterministic example input, values in [0, 1] (fuzzy-logic range),
    # activations streamed in bf16 end-to-end
    x = jax.random.uniform(kx, (B, N_IN), dtype=jnp.float32).astype(jnp.bfloat16)

    # deterministic "learnable" sampling parameters: [N_OUT, degree] positions
    sample_parameters = jax.random.uniform(
        kp, (N_OUT, DEGREE), dtype=jnp.float32, minval=0.0, maxval=N_IN - 1.0
    )

    w0, w1 = build_interp_matrices(sample_parameters, N_IN)
    w_cat, n_out_p = fuse_and_pad_weights(w0, w1)

    out = sampler_layer_forward(x, w_cat, residual=True, tb=512)
    out = jax.block_until_ready(out)
    if n_out_p != N_OUT:
        out = out[:, :N_OUT]
    assert out.shape == (B, N_OUT)
    out_f32 = out.astype(jnp.float32)

    # reference 1: same bf16-quantized operands, f32 accumulation (tight-ish;
    # the kernel's final bf16 store adds ~1 ulp on values up to ~2)
    x_q = x.astype(jnp.float32)
    w0_q = w0.astype(jnp.bfloat16).astype(jnp.float32)
    w1_q = w1.astype(jnp.bfloat16).astype(jnp.float32)
    s0_q = jnp.dot(x_q, w0_q, precision=lax.Precision.HIGHEST)
    s1_q = jnp.dot(x_q, w1_q, precision=lax.Precision.HIGHEST)
    ref_q = (1.0 - s0_q * s1_q) + x_q
    assert jnp.allclose(out_f32, ref_q, atol=2e-2, rtol=2e-2), \
        float(jnp.max(jnp.abs(out_f32 - ref_q)))

    # reference 2: full-f32 module semantics (loose; bf16 weight/act quantization)
    s0_f = jnp.dot(x_q, w0, precision=lax.Precision.HIGHEST)
    s1_f = jnp.dot(x_q, w1, precision=lax.Precision.HIGHEST)
    ref_f = (1.0 - s0_f * s1_f) + x_q
    assert jnp.allclose(out_f32, ref_f, atol=6e-2, rtol=6e-2), \
        float(jnp.max(jnp.abs(out_f32 - ref_f)))

    # TODO(synk): sample_parameters_predictor (data-dependent sampling points)
    # is None in this instantiation; a predictor would need its own kernel.
    print("KERNEL_OK")
</pallas_src>

<mosaic_0001>
module attributes {stable_mosaic.version = 11 : i64} {
  func.func @kernel(%arg0: i32, %arg1: memref<512x128xbf16, #tpu.memory_space<vmem>>, %arg2: memref<128x256xbf16, #tpu.memory_space<vmem>>, %arg3: memref<512x128xbf16, #tpu.memory_space<vmem>>) attributes {dimension_semantics = [#tpu.dimension_semantics<parallel>], iteration_bounds = array<i64: 3>, scalar_prefetch = 0 : i64, scratch_operands = 0 : i64, tpu.core_type = #tpu.core_type<tc>, window_params = [{transform_indices = @transform_0, window_bounds = array<i64: 512, 128>}, {pipeline_mode = #tpu.pipeline_mode<synchronous>, transform_indices = @transform_1, window_bounds = array<i64: 128, 256>}, {transform_indices = @transform_2, window_bounds = array<i64: 512, 128>}]} {
    %c0 = arith.constant 0 : index
    %c0_0 = arith.constant 0 : index
    %0 = vector.load %arg1[%c0, %c0_0] : memref<512x128xbf16, #tpu.memory_space<vmem>>, vector<512x128xbf16>
    %c0_1 = arith.constant 0 : index
    %c0_2 = arith.constant 0 : index
    %1 = vector.load %arg2[%c0_1, %c0_2] : memref<128x256xbf16, #tpu.memory_space<vmem>>, vector<128x256xbf16>
    %cst = arith.constant dense<0.000000e+00> : vector<512x256xf32>
    %2 = tpu.matmul %0, %1, %cst {dimension_numbers = #tpu.dot_dimension_numbers<[1], [0], [0], [1], [0, 0, 1, 1], [], []>} : vector<512x128xbf16>, vector<128x256xbf16>, vector<512x256xf32> -> vector<512x256xf32>
    %3 = vector.extract_strided_slice %2 {offsets = [0, 0], sizes = [512, 128], strides = [1, 1]} : vector<512x256xf32> to vector<512x128xf32>
    %4 = vector.extract_strided_slice %2 {offsets = [0, 128], sizes = [512, 128], strides = [1, 1]} : vector<512x256xf32> to vector<512x128xf32>
    %5 = arith.mulf %3, %4 : vector<512x128xf32>
    %cst_3 = arith.constant 1.000000e+00 : f32
    %6 = vector.broadcast %cst_3 : f32 to vector<512x128xf32>
    %7 = arith.subf %6, %5 : vector<512x128xf32>
    %8 = arith.extf %0 : vector<512x128xbf16> to vector<512x128xf32>
    %9 = arith.addf %7, %8 : vector<512x128xf32>
    %10 = arith.truncf %9 : vector<512x128xf32> to vector<512x128xbf16>
    %c0_4 = arith.constant 0 : index
    %c0_5 = arith.constant 0 : index
    %11 = vector.load %arg3[%c0_4, %c0_5] : memref<512x128xbf16, #tpu.memory_space<vmem>>, vector<512x128xbf16>
    tpu.vector_store %arg3[%c0_4, %c0_5], %10 {strides = array<i32>} : memref<512x128xbf16, #tpu.memory_space<vmem>>, vector<512x128xbf16>,
    return
  }
  func.func @transform_0(%arg0: i32) -> (i32, i32) {
    %c0_i32 = arith.constant 0 : i32
    %c0_i32_0 = arith.constant 0 : i32
    return %arg0, %c0_i32 : i32, i32
  }
  func.func @transform_1(%arg0: i32) -> (i32, i32) {
    %c0_i32 = arith.constant 0 : i32
    %c0_i32_0 = arith.constant 0 : i32
    %c0_i32_1 = arith.constant 0 : i32
    return %c0_i32, %c0_i32_0 : i32, i32
  }
  func.func @transform_2(%arg0: i32) -> (i32, i32) {
    %c0_i32 = arith.constant 0 : i32
    %c0_i32_0 = arith.constant 0 : i32
    return %arg0, %c0_i32 : i32, i32
  }
}

</mosaic_0001>

<llo_original>
// kernel: tpu_custom_call.1
$region0: #{tpu_custom_call.1}
  #allocation0 [shape = 'u32[]', space=smem, size = 0x4, offset = 0x4, fixed_abs, tag = 'smem constant byte address 0x4 - core index']
  #allocation1 [shape = 'u32[144,128]{1,0:T(1,128)}', space=vmem, size = 0x12000, scoped, tag = 'internal scratch']
  %s0 = inlined_call_operand.hbm [shape: bf16[1280,128], index: 0, kind: input, shape index: {}]
  %s1 = inlined_call_operand.hbm [shape: bf16[128,256], index: 1, kind: input, shape index: {}]
  %s2 = inlined_call_operand.hbm [shape: bf16[1280,128], index: 2, kind: output, shape index: {}]
  %s3 = sld [smem:[#allocation0]]
  $region49: #{tpu_custom_call.1} parent=0
    _
  %s5 = ssub.s32 1, %s3
  %s6 = scalar_select 0, %s5, %s3
  $region1: #{tpu_custom_call.1} parent=0
    #allocation2 [shape = 'u8[262144]{0}', space=vmem, size = 0x40000, scoped, tag = 'input window, operand 0']
    #allocation3 [shape = 's32[2]{0}', space=sflag, size = 0x8, scoped, tag = 'scoped memory for tpu_custom_call.1']
    #allocation4 [shape = 's32[2]{0}', space=sflag, size = 0x8, scoped, tag = 'scoped memory for tpu_custom_call.1']
    #allocation5 [shape = 'u8[65536]{0}', space=vmem, size = 0x10000, scoped, tag = 'input window, operand 1, single buffered']
    #allocation6 [shape = 's32[1]{0}', space=sflag, size = 0x4, scoped, tag = 'scoped memory for tpu_custom_call.1']
    #allocation7 [shape = 'u8[262144]{0}', space=vmem, size = 0x40000, scoped, tag = 'output window, operand 0']
    %7 = vsyncpa [#allocation3], 0
    %s8 = scalar_lea.sflag [#allocation3], 1
    %9 = vsyncpa %s8, 0
    %10 = vsyncpa [#allocation6], 0
    %11 = vsyncpa [#allocation4], 0
    %s12 = scalar_lea.sflag [#allocation4], 1
    %13 = vsyncpa %s12, 0
    loop: start=0, step=1, limit=5
    $region2: #{tpu_custom_call.1} parent=1 // loop_pre_header
      _
    $region3: #{tpu_custom_call.1} parent=1 // loop_header
      %s15 = sphi 0, %s19
      %p16 = scmp.ge.s32.totalorder %s15, 5
      %s25 = sphi 0, %s27
      %s28 = sphi 0, %s25
      %s29 = sphi 0, %s28
      %s45 = sphi 0, %s29
      %s49 = sphi 0, %s49
      %s51 = sphi 0, %s49
      %s52 = sphi 0, %s51
      %s66 = sphi 0, %s52
      %s72 = sphi 0, %s74
      %s75 = sphi 0, %s72
      %s76 = sphi 0, %s75
      %s92 = sphi 0, %s76
    $region4: #{tpu_custom_call.1} parent=1 // loop_header_branch
      %18 = sbr.rel (%p16) target = $region8
    $region5: #{tpu_custom_call.1} parent=1 // loop_body
      %s20 = ssub.s32 %s15, 1
      %s21 = ssub.s32 %s15, 2
      %s22 = sadd.s32 %s15, 1
      %s23 = ssub.s32 %s15, %s22
      %p24 = scmp.eq.s32.totalorder %s23, 0
      %s26 = sadd.s32 %s25, 1
      %s27 = scalar_select %p24, %s25, %s26
      %p30 = pneg %p24
      %p31 = scmp.eq.s32.totalorder %s15, 2
      %p32 = por %p30, %p31
      %p33 = scmp.ne.s32.totalorder %s25, %s28
      %p34 = scmp.eq.s32.totalorder %s15, 0
      %p35 = por %p33, %p34
      %p36 = scmp.ne.s32.totalorder %s25, %s28
      %p37 = scmp.eq.s32.totalorder %s20, 2
      %p38 = por %p36, %p37
      %p39 = scmp.ne.s32.totalorder %s28, %s29
      %p40 = scmp.eq.s32.totalorder %s20, 0
      %p41 = por %p39, %p40
      %p42 = scmp.ne.s32.totalorder %s28, %s29
      %p43 = scmp.eq.s32.totalorder %s21, 2
      %p44 = por %p42, %p43
      %p46 = scmp.ne.s32.totalorder %s29, %s45
      %p47 = scmp.eq.s32.totalorder %s21, 0
      %p48 = por %p46, %p47
      %s50 = sadd.s32 %s49, 1
      %p53 = scmp.eq.s32.totalorder %s15, 2
      %p54 = scmp.ne.s32.totalorder %s49, %s51
      %p55 = scmp.eq.s32.totalorder %s15, 0
      %p56 = por %p54, %p55
      %p57 = scmp.ne.s32.totalorder %s49, %s51
      %p58 = scmp.eq.s32.totalorder %s20, 2
      %p59 = por %p57, %p58
      %p60 = scmp.ne.s32.totalorder %s51, %s52
      %p61 = scmp.eq.s32.totalorder %s20, 0
      %p62 = por %p60, %p61
      %p63 = scmp.ne.s32.totalorder %s51, %s52
      %p64 = scmp.eq.s32.totalorder %s21, 2
      %p65 = por %p63, %p64
      %p67 = scmp.ne.s32.totalorder %s52, %s66
      %p68 = scmp.eq.s32.totalorder %s21, 0
      %p69 = por %p67, %p68
      %s70 = ssub.s32 %s15, %s22
      %p71 = scmp.eq.s32.totalorder %s70, 0
      %s73 = sadd.s32 %s72, 1
      %s74 = scalar_select %p71, %s72, %s73
      %p77 = pneg %p71
      %p78 = scmp.eq.s32.totalorder %s15, 2
      %p79 = por %p77, %p78
      %p80 = scmp.ne.s32.totalorder %s72, %s75
      %p81 = scmp.eq.s32.totalorder %s15, 0
      %p82 = por %p80, %p81
      %p83 = scmp.ne.s32.totalorder %s72, %s75
      %p84 = scmp.eq.s32.totalorder %s20, 2
      %p85 = por %p83, %p84
      %p86 = scmp.ne.s32.totalorder %s75, %s76
      %p87 = scmp.eq.s32.totalorder %s20, 0
      %p88 = por %p86, %p87
      %p89 = scmp.ne.s32.totalorder %s75, %s76
      %p90 = scmp.eq.s32.totalorder %s21, 2
      %p91 = por %p89, %p90
      %p93 = scmp.ne.s32.totalorder %s76, %s92
      %p94 = scmp.eq.s32.totalorder %s21, 0
      %p95 = por %p93, %p94
      %p96 = scmp.le.s32.totalorder 1, %s15
      %p97 = scmp.lt.s32.totalorder %s15, 4
      %p98 = pnand %p96, %p97
      %p99 = pneg %p98
      // Predicated region
      $region9: #{tpu_custom_call.1} parent=5 // pred_check
        _
      $region10: #{tpu_custom_call.1} parent=5 // pred_check_branch
        %101 = sbr.rel (%p98) target = $region12
      $region11: #{tpu_custom_call.1} parent=5 // pred_region
        %s102 = ssub.s32 %s15, 1
        // Predicated region
        $region13: #{tpu_custom_call.1} parent=11 // pred_check
          %p103 = pneg %p62
        $region14: #{tpu_custom_call.1} parent=11 // pred_check_branch
          %105 = sbr.rel (%p103) target = $region16
        $region15: #{tpu_custom_call.1} parent=11 // pred_region
          %s107 = ssub.s32 2048, 2048
          %108 = vsyncadd [#allocation6], %s107
          %s109 = sshll.u32 [#allocation5], 4
          %s110 = int_to_ptr.vmem [resolvable:$true] %s109
          %115 = dma.hbm_to_vmem [thread:$0]  %s1, 2048, %s110, [#allocation6], 128, 128, 8
        $region16: #{tpu_custom_call.1} parent=11 // pred_fallthru
          _
      $region12: #{tpu_custom_call.1} parent=5 // pred_fallthru
        _
      %p116 = scmp.lt.s32.totalorder %s15, 3
      // Predicated region
      $region17: #{tpu_custom_call.1} parent=5 // pred_check
        %p117 = pneg %p116
      $region18: #{tpu_custom_call.1} parent=5 // pred_check_branch
        %119 = sbr.rel (%p117) target = $region20
      $region19: #{tpu_custom_call.1} parent=5 // pred_region
        // Predicated region
        $region21: #{tpu_custom_call.1} parent=19 // pred_check
          %p120 = pneg %p35
        $region22: #{tpu_custom_call.1} parent=19 // pred_check_branch
          %122 = sbr.rel (%p120) target = $region24
        $region23: #{tpu_custom_call.1} parent=19 // pred_region
          %s123 = sand.u32 %s25, 1
          %s124 = scalar_lea.sflag [#allocation3], %s123
          %s125 = sand.u32 %s25, 1
          %s126 = smul.addr %s125, 256
          %s127 = scalar_lea.vmem [#allocation2], %s126
          %s128 = smul.u32 64, %s15
          %s129 = ssub.s32 160, %s128
          %p130 = scmp.lt.s32.totalorder %s129, 64
          %s131 = scalar_select %p130, %s129, 64
          %s132 = smul.u32 64, %s131
          %s134 = ssub.s32 4096, %s132
          %135 = vsyncadd %s124, %s134
          %p136 = scmp.ne.s32.totalorder 0, %s132
          %s137 = smul.addr %s128, 64
          %s138 = scalar_lea.hbm %s0, %s137
          %s139 = smul.u32 4, %s131
          %s140 = sshll.u32 %s127, 4
          %s141 = int_to_ptr.vmem [resolvable:$true] %s140
          %s142 = sshll.u32 %s139, 4
          %146 = dma.hbm_to_vmem [thread:$0]  (%p136), %s138, %s142, %s141, %s124, 64, 64, 4
        $region24: #{tpu_custom_call.1} parent=19 // pred_fallthru
          _
      $region20: #{tpu_custom_call.1} parent=5 // pred_fallthru
        _
      %p147 = scmp.le.s32.totalorder 1, %s15
      %p148 = scmp.lt.s32.totalorder %s15, 4
      %p149 = pnand %p147, %p148
      %p150 = pneg %p149
      // Predicated region
      $region25: #{tpu_custom_call.1} parent=5 // pred_check
        _
      $region26: #{tpu_custom_call.1} parent=5 // pred_check_branch
        %152 = sbr.rel (%p149) target = $region28
      $region27: #{tpu_custom_call.1} parent=5 // pred_region
        %s153 = ssub.s32 %s15, 1
        %s154 = sand.u32 %s28, 1
        %s155 = scalar_lea.sflag [#allocation3], %s154
        %s156 = sand.u32 %s28, 1
        %s157 = smul.addr %s156, 256
        %s158 = scalar_lea.vmem [#allocation2], %s157
        // Predicated region
        $region29: #{tpu_custom_call.1} parent=27 // pred_check
          %p159 = pneg %p41
        $region30: #{tpu_custom_call.1} parent=27 // pred_check_branch
          %161 = sbr.rel (%p159) target = $region32
        $region31: #{tpu_custom_call.1} parent=27 // pred_region
          %162 = dma.done %s155, 4096
        $region32: #{tpu_custom_call.1} parent=27 // pred_fallthru
          _
        // Predicated region
        $region33: #{tpu_custom_call.1} parent=27 // pred_check
          %p163 = pneg %p62
        $region34: #{tpu_custom_call.1} parent=27 // pred_check_branch
          %165 = sbr.rel (%p163) target = $region36
        $region35: #{tpu_custom_call.1} parent=27 // pred_region
          %166 = dma.done [#allocation6], 2048
        $region36: #{tpu_custom_call.1} parent=27 // pred_fallthru
          _
        %s167 = sand.u32 %s28, 1
        %s168 = scalar_lea.sflag [#allocation3], %s167
        %s169 = sand.u32 %s28, 1
        %s170 = smul.addr %s169, 256
        %s171 = scalar_lea.vmem [#allocation2], %s170
        %p172 = pneg %p41
        %p173 = pneg %p38
        %p174 = pneg %p62
        %p175 = pneg %p59
        %p176 = pneg %p88
        %p177 = pneg %p85
        %s178 = sand.u32 %s75, 1
        %s179 = scalar_lea.sflag [#allocation4], %s178
        %s180 = sand.u32 %s75, 1
        %s181 = smul.addr %s180, 256
        %s182 = scalar_lea.vmem [#allocation7], %s181
        %s183 = smul.u32 64, %s20
        %s184 = ssub.s32 160, %s183
        %p185 = scmp.lt.s32.totalorder %s184, 64
        %s186 = scalar_select %p185, %s184, 64
        %s187 = smul.u32 64, %s186
        %s188 = smul.u32 64, %s20
        %s189 = ssub.s32 160, %s188
        %p190 = scmp.lt.s32.totalorder %s189, 64
        %s191 = scalar_select %p190, %s189, 64
        %s192 = smul.u32 64, %s191
        %v194 = vld [vmem:[%s158] sm:$0xf]
        %v195 = vld [vmem:[%s158 + $0x4] sm:$0xf]
        %v196 = vld [vmem:[%s158 + $0x8] sm:$0xf]
        %v197 = vld [vmem:[%s158 + $0xc] sm:$0xf]
        %v198 = vld [vmem:[%s158 + $0x10] sm:$0xf]
        %v199 = vld [vmem:[%s158 + $0x14] sm:$0xf]
        %v200 = vld [vmem:[%s158 + $0x18] sm:$0xf]
        %v201 = vld [vmem:[%s158 + $0x1c] sm:$0xf]
        %v202 = vld [vmem:[%s158 + $0x20] sm:$0xf]
        %v203 = vld [vmem:[%s158 + $0x24] sm:$0xf]
        %v204 = vld [vmem:[%s158 + $0x28] sm:$0xf]
        %v205 = vld [vmem:[%s158 + $0x2c] sm:$0xf]
        %v206 = vld [vmem:[%s158 + $0x30] sm:$0xf]
        %v207 = vld [vmem:[%s158 + $0x34] sm:$0xf]
        %v208 = vld [vmem:[%s158 + $0x38] sm:$0xf]
        %v209 = vld [vmem:[%s158 + $0x3c] sm:$0xf]
        %v210 = vld [vmem:[%s158 + $0x40] sm:$0xf]
        %v211 = vld [vmem:[%s158 + $0x44] sm:$0xf]
        %v212 = vld [vmem:[%s158 + $0x48] sm:$0xf]
        %v213 = vld [vmem:[%s158 + $0x4c] sm:$0xf]
        %v214 = vld [vmem:[%s158 + $0x50] sm:$0xf]
        %v215 = vld [vmem:[%s158 + $0x54] sm:$0xf]
        %v216 = vld [vmem:[%s158 + $0x58] sm:$0xf]
        %v217 = vld [vmem:[%s158 + $0x5c] sm:$0xf]
        %v218 = vld [vmem:[%s158 + $0x60] sm:$0xf]
        %v219 = vld [vmem:[%s158 + $0x64] sm:$0xf]
        %v220 = vld [vmem:[%s158 + $0x68] sm:$0xf]
        %v221 = vld [vmem:[%s158 + $0x6c] sm:$0xf]
        %v222 = vld [vmem:[%s158 + $0x70] sm:$0xf]
        %v223 = vld [vmem:[%s158 + $0x74] sm:$0xf]
        %v224 = vld [vmem:[%s158 + $0x78] sm:$0xf]
        %v225 = vld [vmem:[%s158 + $0x7c] sm:$0xf]
        %v226 = vld [vmem:[%s158 + $0x80] sm:$0xf]
        %v227 = vld [vmem:[%s158 + $0x84] sm:$0xf]
        %v228 = vld [vmem:[%s158 + $0x88] sm:$0xf]
        %v229 = vld [vmem:[%s158 + $0x8c] sm:$0xf]
        %v230 = vld [vmem:[%s158 + $0x90] sm:$0xf]
        %v231 = vld [vmem:[%s158 + $0x94] sm:$0xf]
        %v232 = vld [vmem:[%s158 + $0x98] sm:$0xf]
        %v233 = vld [vmem:[%s158 + $0x9c] sm:$0xf]
        %v234 = vld [vmem:[%s158 + $0xa0] sm:$0xf]
        %v235 = vld [vmem:[%s158 + $0xa4] sm:$0xf]
        %v236 = vld [vmem:[%s158 + $0xa8] sm:$0xf]
        %v237 = vld [vmem:[%s158 + $0xac] sm:$0xf]
        %v238 = vld [vmem:[%s158 + $0xb0] sm:$0xf]
        %v239 = vld [vmem:[%s158 + $0xb4] sm:$0xf]
        %v240 = vld [vmem:[%s158 + $0xb8] sm:$0xf]
        %v241 = vld [vmem:[%s158 + $0xbc] sm:$0xf]
        %v242 = vld [vmem:[%s158 + $0xc0] sm:$0xf]
        %v243 = vld [vmem:[%s158 + $0xc4] sm:$0xf]
        %v244 = vld [vmem:[%s158 + $0xc8] sm:$0xf]
        %v245 = vld [vmem:[%s158 + $0xcc] sm:$0xf]
        %v246 = vld [vmem:[%s158 + $0xd0] sm:$0xf]
        %v247 = vld [vmem:[%s158 + $0xd4] sm:$0xf]
        %v248 = vld [vmem:[%s158 + $0xd8] sm:$0xf]
        %v249 = vld [vmem:[%s158 + $0xdc] sm:$0xf]
        %v250 = vld [vmem:[%s158 + $0xe0] sm:$0xf]
        %v251 = vld [vmem:[%s158 + $0xe4] sm:$0xf]
        %v252 = vld [vmem:[%s158 + $0xe8] sm:$0xf]
        %v253 = vld [vmem:[%s158 + $0xec] sm:$0xf]
        %v254 = vld [vmem:[%s158 + $0xf0] sm:$0xf]
        %v255 = vld [vmem:[%s158 + $0xf4] sm:$0xf]
        %v256 = vld [vmem:[%s158 + $0xf8] sm:$0xf]
        %v257 = vld [vmem:[%s158 + $0xfc] sm:$0xf]
        %v258 = vld [vmem:[#allocation5] sm:$0xff]
        %v259 = vld [vmem:[#allocation5 + $0x8] sm:$0xff]
        %v260 = vld [vmem:[#allocation5 + $0x10] sm:$0xff]
        %v261 = vld [vmem:[#allocation5 + $0x18] sm:$0xff]
        %v262 = vld [vmem:[#allocation5 + $0x20] sm:$0xff]
        %v263 = vld [vmem:[#allocation5 + $0x28] sm:$0xff]
        %v264 = vld [vmem:[#allocation5 + $0x30] sm:$0xff]
        %v265 = vld [vmem:[#allocation5 + $0x38] sm:$0xff]
        %v266 = vld [vmem:[#allocation5 + $0x40] sm:$0xff]
        %v267 = vld [vmem:[#allocation5 + $0x48] sm:$0xff]
        %v268 = vld [vmem:[#allocation5 + $0x50] sm:$0xff]
        %v269 = vld [vmem:[#allocation5 + $0x58] sm:$0xff]
        %v270 = vld [vmem:[#allocation5 + $0x60] sm:$0xff]
        %v271 = vld [vmem:[#allocation5 + $0x68] sm:$0xff]
        %v272 = vld [vmem:[#allocation5 + $0x70] sm:$0xff]
        %v273 = vld [vmem:[#allocation5 + $0x78] sm:$0xff]
        %v338 = vunpack.c.l.b16 %v194
        %v339 = vunpack.c.l.b16 %v195
        %v340 = vunpack.c.l.b16 %v196
        %v341 = vunpack.c.l.b16 %v197
        %v342 = vunpack.c.l.b16 %v198
        %v343 = vunpack.c.l.b16 %v199
        %v344 = vunpack.c.l.b16 %v200
        %v345 = vunpack.c.l.b16 %v201
        %v346 = vunpack.c.l.b16 %v202
        %v347 = vunpack.c.l.b16 %v203
        %v348 = vunpack.c.l.b16 %v204
        %v349 = vunpack.c.l.b16 %v205
        %v350 = vunpack.c.l.b16 %v206
        %v351 = vunpack.c.l.b16 %v207
        %v352 = vunpack.c.l.b16 %v208
        %v353 = vunpack.c.l.b16 %v209
        %v354 = vunpack.c.l.b16 %v210
        %v355 = vunpack.c.l.b16 %v211
        %v356 = vunpack.c.l.b16 %v212
        %v357 = vunpack.c.l.b16 %v213
        %v358 = vunpack.c.l.b16 %v214
        %v359 = vunpack.c.l.b16 %v215
        %v360 = vunpack.c.l.b16 %v216
        %v361 = vunpack.c.l.b16 %v217
        %v362 = vunpack.c.l.b16 %v218
        %v363 = vunpack.c.l.b16 %v219
        %v364 = vunpack.c.l.b16 %v220
        %v365 = vunpack.c.l.b16 %v221
        %v366 = vunpack.c.l.b16 %v222
        %v367 = vunpack.c.l.b16 %v223
        %v368 = vunpack.c.l.b16 %v224
        %v369 = vunpack.c.l.b16 %v225
        %v370 = vunpack.c.l.b16 %v226
        %v371 = vunpack.c.l.b16 %v227
        %v372 = vunpack.c.l.b16 %v228
        %v373 = vunpack.c.l.b16 %v229
        %v374 = vunpack.c.l.b16 %v230
        %v375 = vunpack.c.l.b16 %v231
        %v376 = vunpack.c.l.b16 %v232
        %v377 = vunpack.c.l.b16 %v233
        %v378 = vunpack.c.l.b16 %v234
        %v379 = vunpack.c.l.b16 %v235
        %v380 = vunpack.c.l.b16 %v236
        %v381 = vunpack.c.l.b16 %v237
        %v382 = vunpack.c.l.b16 %v238
        %v383 = vunpack.c.l.b16 %v239
        %v384 = vunpack.c.l.b16 %v240
        %v385 = vunpack.c.l.b16 %v241
        %v386 = vunpack.c.l.b16 %v242
        %v387 = vunpack.c.l.b16 %v243
        %v388 = vunpack.c.l.b16 %v244
        %v389 = vunpack.c.l.b16 %v245
        %v390 = vunpack.c.l.b16 %v246
        %v391 = vunpack.c.l.b16 %v247
        %v392 = vunpack.c.l.b16 %v248
        %v393 = vunpack.c.l.b16 %v249
        %v394 = vunpack.c.l.b16 %v250
        %v395 = vunpack.c.l.b16 %v251
        %v396 = vunpack.c.l.b16 %v252
        %v397 = vunpack.c.l.b16 %v253
        %v398 = vunpack.c.l.b16 %v254
        %v399 = vunpack.c.l.b16 %v255
        %v400 = vunpack.c.l.b16 %v256
        %v401 = vunpack.c.l.b16 %v257
        %v402 = vpack.c.b16 %v339, %v338
        %v403 = vpack.c.b16 %v341, %v340
        %v404 = vpack.c.b16 %v343, %v342
        %v405 = vpack.c.b16 %v345, %v344
        %v406 = vpack.c.b16 %v347, %v346
        %v407 = vpack.c.b16 %v349, %v348
        %v408 = vpack.c.b16 %v351, %v350
        %v409 = vpack.c.b16 %v353, %v352
        %v410 = vpack.c.b16 %v355, %v354
        %v411 = vpack.c.b16 %v357, %v356
        %v412 = vpack.c.b16 %v359, %v358
        %v413 = vpack.c.b16 %v361, %v360
        %v414 = vpack.c.b16 %v363, %v362
        %v415 = vpack.c.b16 %v365, %v364
        %v416 = vpack.c.b16 %v367, %v366
        %v417 = vpack.c.b16 %v369, %v368
        %v418 = vpack.c.b16 %v371, %v370
        %v419 = vpack.c.b16 %v373, %v372
        %v420 = vpack.c.b16 %v375, %v374
        %v421 = vpack.c.b16 %v377, %v376
        %v422 = vpack.c.b16 %v379, %v378
        %v423 = vpack.c.b16 %v381, %v380
        %v424 = vpack.c.b16 %v383, %v382
        %v425 = vpack.c.b16 %v385, %v384
        %v426 = vpack.c.b16 %v387, %v386
        %v427 = vpack.c.b16 %v389, %v388
        %v428 = vpack.c.b16 %v391, %v390
        %v429 = vpack.c.b16 %v393, %v392
        %v430 = vpack.c.b16 %v395, %v394
        %v431 = vpack.c.b16 %v397, %v396
        %v432 = vpack.c.b16 %v399, %v398
        %v433 = vpack.c.b16 %v401, %v400
        %v482 = vunpack.c.l.b16 %v258
        %v483 = vunpack.c.h.b16 %v258
        %v484 = vunpack.c.l.b16 %v259
        %v485 = vunpack.c.h.b16 %v259
        %v486 = vunpack.c.l.b16 %v260
        %v487 = vunpack.c.h.b16 %v260
        %v488 = vunpack.c.l.b16 %v261
        %v489 = vunpack.c.h.b16 %v261
        %v490 = vunpack.c.l.b16 %v262
        %v491 = vunpack.c.h.b16 %v262
        %v492 = vunpack.c.l.b16 %v263
        %v493 = vunpack.c.h.b16 %v263
        %v494 = vunpack.c.l.b16 %v264
        %v495 = vunpack.c.h.b16 %v264
        %v496 = vunpack.c.l.b16 %v265
        %v497 = vunpack.c.h.b16 %v265
        %v498 = vunpack.c.l.b16 %v266
        %v499 = vunpack.c.h.b16 %v266
        %v500 = vunpack.c.l.b16 %v267
        %v501 = vunpack.c.h.b16 %v267
        %v502 = vunpack.c.l.b16 %v268
        %v503 = vunpack.c.h.b16 %v268
        %v504 = vunpack.c.l.b16 %v269
        %v505 = vunpack.c.h.b16 %v269
        %v506 = vunpack.c.l.b16 %v270
        %v507 = vunpack.c.h.b16 %v270
        %v508 = vunpack.c.l.b16 %v271
        %v509 = vunpack.c.h.b16 %v271
        %v510 = vunpack.c.l.b16 %v272
        %v511 = vunpack.c.h.b16 %v272
        %v512 = vunpack.c.l.b16 %v273
        %v513 = vunpack.c.h.b16 %v273
        %v514 = vpack.c.b16 %v484, %v482
        %v515 = vpack.c.b16 %v485, %v483
        %v516 = vpack.c.b16 %v488, %v486
        %v517 = vpack.c.b16 %v489, %v487
        %v518 = vpack.c.b16 %v492, %v490
        %v519 = vpack.c.b16 %v493, %v491
        %v520 = vpack.c.b16 %v496, %v494
        %v521 = vpack.c.b16 %v497, %v495
        %v522 = vpack.c.b16 %v500, %v498
        %v523 = vpack.c.b16 %v501, %v499
        %v524 = vpack.c.b16 %v504, %v502
        %v525 = vpack.c.b16 %v505, %v503
        %v526 = vpack.c.b16 %v508, %v506
        %v527 = vpack.c.b16 %v509, %v507
        %v528 = vpack.c.b16 %v512, %v510
        %v529 = vpack.c.b16 %v513, %v511
        %546 = vmatprep.subr.bf16.mxu0 %v515
        %547 = vmatpush1.bf16.msra.mxu0 %v514
        %548 = vmatprep.subr.bf16.mxu0 %v517
        %549 = vmatpush1.bf16.msra.mxu0 %v516
        %550 = vmatprep.subr.bf16.mxu0 %v519
        %551 = vmatpush1.bf16.msra.mxu0 %v518
        %552 = vmatprep.subr.bf16.mxu0 %v521
        %553 = vmatpush1.bf16.msra.mxu0 %v520
        %554 = vmatprep.subr.bf16.mxu0 %v523
        %555 = vmatpush1.bf16.msra.mxu0 %v522
        %556 = vmatprep.subr.bf16.mxu0 %v525
        %557 = vmatpush1.bf16.msra.mxu0 %v524
        %558 = vmatprep.subr.bf16.mxu0 %v527
        %559 = vmatpush1.bf16.msra.mxu0 %v526
        %560 = vmatprep.subr.bf16.mxu0 %v529
        %561 = vmatpush1.bf16.msra.mxu0 %v528
        %562 = vmatprep.subr.bf16.mxu0 0
        %563 = vmatpush1.bf16.msra.mxu0 0
        %564 = vmatprep.subr.bf16.mxu0 0
        %565 = vmatpush1.bf16.msra.mxu0 0
        %566 = vmatprep.subr.bf16.mxu0 0
        %567 = vmatpush1.bf16.msra.mxu0 0
        %568 = vmatprep.subr.bf16.mxu0 0
        %569 = vmatpush1.bf16.msra.mxu0 0
        %570 = vmatprep.subr.bf16.mxu0 0
        %571 = vmatpush1.bf16.msra.mxu0 0
        %572 = vmatprep.subr.bf16.mxu0 0
        %573 = vmatpush1.bf16.msra.mxu0 0
        %574 = vmatprep.subr.bf16.mxu0 0
        %575 = vmatpush1.bf16.msra.mxu0 0
        %576 = vmatprep.subr.bf16.mxu0 0
        %577 = vmatpush1.bf16.msra.mxu0 0
        %578 = vmatprep.mubr.bf16.mxu0 0
        %579 = vmatmul.mubr.bf16.gmra.mrb[0].mxu0 %v402
        %v580 = vpop.f32.mrb[0].mxu0
        %v581 = vadd.f32 0.0, %v580
        %v582 = vpop.f32.mrb[0].mxu0
        %v583 = vadd.f32 0.0, %v582
        %v584 = vpop.f32.mrb[0].mxu0
        %v585 = vadd.f32 0.0, %v584
        %v586 = vpop.f32.mrb[0].mxu0
        %v587 = vadd.f32 0.0, %v586
        %588 = vmatprep.mubr.bf16.mxu0 0
        %589 = vmatmul.mubr.bf16.gmra.mrb[0].mxu0 %v403
        %v590 = vpop.f32.mrb[0].mxu0
        %v591 = vadd.f32 0.0, %v590
        %v592 = vpop.f32.mrb[0].mxu0
        %v593 = vadd.f32 0.0, %v592
        %v594 = vpop.f32.mrb[0].mxu0
        %v595 = vadd.f32 0.0, %v594
        %v596 = vpop.f32.mrb[0].mxu0
        %v597 = vadd.f32 0.0, %v596
        %598 = vmatprep.mubr.bf16.mxu0 0
        %599 = vmatmul.mubr.bf16.gmra.mrb[0].mxu0 %v404
        %v600 = vpop.f32.mrb[0].mxu0
        %v601 = vadd.f32 0.0, %v600
        %v602 = vpop.f32.mrb[0].mxu0
        %v603 = vadd.f32 0.0, %v602
        %v604 = vpop.f32.mrb[0].mxu0
        %v605 = vadd.f32 0.0, %v604
        %v606 = vpop.f32.mrb[0].mxu0
        %v607 = vadd.f32 0.0, %v606
        %608 = vmatprep.mubr.bf16.mxu0 0
        %609 = vmatmul.mubr.bf16.gmra.mrb[0].mxu0 %v405
        %v610 = vpop.f32.mrb[0].mxu0
        %v611 = vadd.f32 0.0, %v610
        %v612 = vpop.f32.mrb[0].mxu0
        %v613 = vadd.f32 0.0, %v612
        %v614 = vpop.f32.mrb[0].mxu0
        %v615 = vadd.f32 0.0, %v614
        %v616 = vpop.f32.mrb[0].mxu0
        %v617 = vadd.f32 0.0, %v616
        %618 = vmatprep.mubr.bf16.mxu0 0
        %619 = vmatmul.mubr.bf16.gmra.mrb[0].mxu0 %v406
        %v620 = vpop.f32.mrb[0].mxu0
        %v621 = vadd.f32 0.0, %v620
        %v622 = vpop.f32.mrb[0].mxu0
        %v623 = vadd.f32 0.0, %v622
        %v624 = vpop.f32.mrb[0].mxu0
        %v625 = vadd.f32 0.0, %v624
        %v626 = vpop.f32.mrb[0].mxu0
        %v627 = vadd.f32 0.0, %v626
        %628 = vmatprep.mubr.bf16.mxu0 0
        %629 = vmatmul.mubr.bf16.gmra.mrb[0].mxu0 %v407
        %v630 = vpop.f32.mrb[0].mxu0
        %v631 = vadd.f32 0.0, %v630
        %v632 = vpop.f32.mrb[0].mxu0
        %v633 = vadd.f32 0.0, %v632
        %v634 = vpop.f32.mrb[0].mxu0
        %v635 = vadd.f32 0.0, %v634
        %v636 = vpop.f32.mrb[0].mxu0
        %v637 = vadd.f32 0.0, %v636
        %638 = vmatprep.mubr.bf16.mxu0 0
        %639 = vmatmul.mubr.bf16.gmra.mrb[0].mxu0 %v408
        %v640 = vpop.f32.mrb[0].mxu0
        %v641 = vadd.f32 0.0, %v640
        %v642 = vpop.f32.mrb[0].mxu0
        %v643 = vadd.f32 0.0, %v642
        %v644 = vpop.f32.mrb[0].mxu0
        %v645 = vadd.f32 0.0, %v644
        %v646 = vpop.f32.mrb[0].mxu0
        %v647 = vadd.f32 0.0, %v646
        %648 = vmatprep.mubr.bf16.mxu0 0
        %649 = vmatmul.mubr.bf16.gmra.mrb[0].mxu0 %v409
        %v650 = vpop.f32.mrb[0].mxu0
        %v651 = vadd.f32 0.0, %v650
        %v652 = vpop.f32.mrb[0].mxu0
        %v653 = vadd.f32 0.0, %v652
        %v654 = vpop.f32.mrb[0].mxu0
        %v655 = vadd.f32 0.0, %v654
        %v656 = vpop.f32.mrb[0].mxu0
        %v657 = vadd.f32 0.0, %v656
        %658 = vmatprep.mubr.bf16.mxu0 0
        %659 = vmatmul.mubr.bf16.gmra.mrb[0].mxu0 %v410
        %v660 = vpop.f32.mrb[0].mxu0
        %v661 = vadd.f32 0.0, %v660
        %v662 = vpop.f32.mrb[0].mxu0
        %v663 = vadd.f32 0.0, %v662
        %v664 = vpop.f32.mrb[0].mxu0
        %v665 = vadd.f32 0.0, %v664
        %v666 = vpop.f32.mrb[0].mxu0
        %v667 = vadd.f32 0.0, %v666
        %668 = vmatprep.mubr.bf16.mxu0 0
        %669 = vmatmul.mubr.bf16.gmra.mrb[0].mxu0 %v411
        %v670 = vpop.f32.mrb[0].mxu0
        %v671 = vadd.f32 0.0, %v670
        %v672 = vpop.f32.mrb[0].mxu0
        %v673 = vadd.f32 0.0, %v672
        %v674 = vpop.f32.mrb[0].mxu0
        %v675 = vadd.f32 0.0, %v674
        %v676 = vpop.f32.mrb[0].mxu0
        %v677 = vadd.f32 0.0, %v676
        %678 = vmatprep.mubr.bf16.mxu0 0
        %679 = vmatmul.mubr.bf16.gmra.mrb[0].mxu0 %v412
        %v680 = vpop.f32.mrb[0].mxu0
        %v681 = vadd.f32 0.0, %v680
        %v682 = vpop.f32.mrb[0].mxu0
        %v683 = vadd.f32 0.0, %v682
        %v684 = vpop.f32.mrb[0].mxu0
        %v685 = vadd.f32 0.0, %v684
        %v686 = vpop.f32.mrb[0].mxu0
        %v687 = vadd.f32 0.0, %v686
        %688 = vmatprep.mubr.bf16.mxu0 0
        %689 = vmatmul.mubr.bf16.gmra.mrb[0].mxu0 %v413
        %v690 = vpop.f32.mrb[0].mxu0
        %v691 = vadd.f32 0.0, %v690
        %v692 = vpop.f32.mrb[0].mxu0
        %v693 = vadd.f32 0.0, %v692
        %v694 = vpop.f32.mrb[0].mxu0
        %v695 = vadd.f32 0.0, %v694
        %v696 = vpop.f32.mrb[0].mxu0
        %v697 = vadd.f32 0.0, %v696
        %698 = vmatprep.mubr.bf16.mxu0 0
        %699 = vmatmul.mubr.bf16.gmra.mrb[0].mxu0 %v414
        %v700 = vpop.f32.mrb[0].mxu0
        %v701 = vadd.f32 0.0, %v700
        %v702 = vpop.f32.mrb[0].mxu0
        %v703 = vadd.f32 0.0, %v702
        %v704 = vpop.f32.mrb[0].mxu0
        %v705 = vadd.f32 0.0, %v704
        %v706 = vpop.f32.mrb[0].mxu0
        %v707 = vadd.f32 0.0, %v706
        %708 = vmatprep.mubr.bf16.mxu0 0
        %709 = vmatmul.mubr.bf16.gmra.mrb[0].mxu0 %v415
        %v710 = vpop.f32.mrb[0].mxu0
        %v711 = vadd.f32 0.0, %v710
        %v712 = vpop.f32.mrb[0].mxu0
        %v713 = vadd.f32 0.0, %v712
        %v714 = vpop.f32.mrb[0].mxu0
        %v715 = vadd.f32 0.0, %v714
        %v716 = vpop.f32.mrb[0].mxu0
        %v717 = vadd.f32 0.0, %v716
        %718 = vmatprep.mubr.bf16.mxu0 0
        %719 = vmatmul.mubr.bf16.gmra.mrb[0].mxu0 %v416
        %v720 = vpop.f32.mrb[0].mxu0
        %v721 = vadd.f32 0.0, %v720
        %v722 = vpop.f32.mrb[0].mxu0
        %v723 = vadd.f32 0.0, %v722
        %v724 = vpop.f32.mrb[0].mxu0
        %v725 = vadd.f32 0.0, %v724
        %v726 = vpop.f32.mrb[0].mxu0
        %v727 = vadd.f32 0.0, %v726
        %728 = vmatprep.mubr.bf16.mxu0 0
        %729 = vmatmul.mubr.bf16.gmra.mrb[0].mxu0 %v417
        %v730 = vpop.f32.mrb[0].mxu0
        %v731 = vadd.f32 0.0, %v730
        %v732 = vpop.f32.mrb[0].mxu0
        %v733 = vadd.f32 0.0, %v732
        %v734 = vpop.f32.mrb[0].mxu0
        %v735 = vadd.f32 0.0, %v734
        %v736 = vpop.f32.mrb[0].mxu0
        %v737 = vadd.f32 0.0, %v736
        %738 = vmatprep.mubr.bf16.mxu0 0
        %739 = vmatmul.mubr.bf16.gmra.mrb[0].mxu0 %v418
        %v740 = vpop.f32.mrb[0].mxu0
        %v741 = vadd.f32 0.0, %v740
        %v742 = vpop.f32.mrb[0].mxu0
        %v743 = vadd.f32 0.0, %v742
        %v744 = vpop.f32.mrb[0].mxu0
        %v745 = vadd.f32 0.0, %v744
        %v746 = vpop.f32.mrb[0].mxu0
        %v747 = vadd.f32 0.0, %v746
        %748 = vmatprep.mubr.bf16.mxu0 0
        %749 = vmatmul.mubr.bf16.gmra.mrb[0].mxu0 %v419
        %v750 = vpop.f32.mrb[0].mxu0
        %v751 = vadd.f32 0.0, %v750
        %v752 = vpop.f32.mrb[0].mxu0
        %v753 = vadd.f32 0.0, %v752
        %v754 = vpop.f32.mrb[0].mxu0
        %v755 = vadd.f32 0.0, %v754
        %v756 = vpop.f32.mrb[0].mxu0
        %v757 = vadd.f32 0.0, %v756
        %758 = vmatprep.mubr.bf16.mxu0 0
        %759 = vmatmul.mubr.bf16.gmra.mrb[0].mxu0 %v420
        %v760 = vpop.f32.mrb[0].mxu0
        %v761 = vadd.f32 0.0, %v760
        %v762 = vpop.f32.mrb[0].mxu0
        %v763 = vadd.f32 0.0, %v762
        %v764 = vpop.f32.mrb[0].mxu0
        %v765 = vadd.f32 0.0, %v764
        %v766 = vpop.f32.mrb[0].mxu0
        %v767 = vadd.f32 0.0, %v766
        %768 = vmatprep.mubr.bf16.mxu0 0
        %769 = vmatmul.mubr.bf16.gmra.mrb[0].mxu0 %v421
        %v770 = vpop.f32.mrb[0].mxu0
        %v771 = vadd.f32 0.0, %v770
        %v772 = vpop.f32.mrb[0].mxu0
        %v773 = vadd.f32 0.0, %v772
        %v774 = vpop.f32.mrb[0].mxu0
        %v775 = vadd.f32 0.0, %v774
        %v776 = vpop.f32.mrb[0].mxu0
        %v777 = vadd.f32 0.0, %v776
        %778 = vmatprep.mubr.bf16.mxu0 0
        %779 = vmatmul.mubr.bf16.gmra.mrb[0].mxu0 %v422
        %v780 = vpop.f32.mrb[0].mxu0
        %v781 = vadd.f32 0.0, %v780
        %v782 = vpop.f32.mrb[0].mxu0
        %v783 = vadd.f32 0.0, %v782
        %v784 = vpop.f32.mrb[0].mxu0
        %v785 = vadd.f32 0.0, %v784
        %v786 = vpop.f32.mrb[0].mxu0
        %v787 = vadd.f32 0.0, %v786
        %788 = vmatprep.mubr.bf16.mxu0 0
        %789 = vmatmul.mubr.bf16.gmra.mrb[0].mxu0 %v423
        %v790 = vpop.f32.mrb[0].mxu0
        %v791 = vadd.f32 0.0, %v790
        %v792 = vpop.f32.mrb[0].mxu0
        %v793 = vadd.f32 0.0, %v792
        %v794 = vpop.f32.mrb[0].mxu0
        %v795 = vadd.f32 0.0, %v794
        %v796 = vpop.f32.mrb[0].mxu0
        %v797 = vadd.f32 0.0, %v796
        %798 = vmatprep.mubr.bf16.mxu0 0
        %799 = vmatmul.mubr.bf16.gmra.mrb[0].mxu0 %v424
        %v800 = vpop.f32.mrb[0].mxu0
        %v801 = vadd.f32 0.0, %v800
        %v802 = vpop.f32.mrb[0].mxu0
        %v803 = vadd.f32 0.0, %v802
        %v804 = vpop.f32.mrb[0].mxu0
        %v805 = vadd.f32 0.0, %v804
        %v806 = vpop.f32.mrb[0].mxu0
        %v807 = vadd.f32 0.0, %v806
        %808 = vmatprep.mubr.bf16.mxu0 0
        %809 = vmatmul.mubr.bf16.gmra.mrb[0].mxu0 %v425
        %v810 = vpop.f32.mrb[0].mxu0
        %v811 = vadd.f32 0.0, %v810
        %v812 = vpop.f32.mrb[0].mxu0
        %v813 = vadd.f32 0.0, %v812
        %v814 = vpop.f32.mrb[0].mxu0
        %v815 = vadd.f32 0.0, %v814
        %v816 = vpop.f32.mrb[0].mxu0
        %v817 = vadd.f32 0.0, %v816
        %818 = vmatprep.mubr.bf16.mxu0 0
        %819 = vmatmul.mubr.bf16.gmra.mrb[0].mxu0 %v426
        %v820 = vpop.f32.mrb[0].mxu0
        %v821 = vadd.f32 0.0, %v820
        %v822 = vpop.f32.mrb[0].mxu0
        %v823 = vadd.f32 0.0, %v822
        %v824 = vpop.f32.mrb[0].mxu0
        %v825 = vadd.f32 0.0, %v824
        %v826 = vpop.f32.mrb[0].mxu0
        %v827 = vadd.f32 0.0, %v826
        %828 = vmatprep.mubr.bf16.mxu0 0
        %829 = vmatmul.mubr.bf16.gmra.mrb[0].mxu0 %v427
        %v830 = vpop.f32.mrb[0].mxu0
        %v831 = vadd.f32 0.0, %v830
        %v832 = vpop.f32.mrb[0].mxu0
        %v833 = vadd.f32 0.0, %v832
        %v834 = vpop.f32.mrb[0].mxu0
        %v835 = vadd.f32 0.0, %v834
        %v836 = vpop.f32.mrb[0].mxu0
        %v837 = vadd.f32 0.0, %v836
        %838 = vmatprep.mubr.bf16.mxu0 0
        %839 = vmatmul.mubr.bf16.gmra.mrb[0].mxu0 %v428
        %v840 = vpop.f32.mrb[0].mxu0
        %v841 = vadd.f32 0.0, %v840
        %v842 = vpop.f32.mrb[0].mxu0
        %v843 = vadd.f32 0.0, %v842
        %v844 = vpop.f32.mrb[0].mxu0
        %v845 = vadd.f32 0.0, %v844
        %v846 = vpop.f32.mrb[0].mxu0
        %v847 = vadd.f32 0.0, %v846
        %848 = vmatprep.mubr.bf16.mxu0 0
        %849 = vmatmul.mubr.bf16.gmra.mrb[0].mxu0 %v429
        %v850 = vpop.f32.mrb[0].mxu0
        %v851 = vadd.f32 0.0, %v850
        %v852 = vpop.f32.mrb[0].mxu0
        %v853 = vadd.f32 0.0, %v852
        %v854 = vpop.f32.mrb[0].mxu0
        %v855 = vadd.f32 0.0, %v854
        %v856 = vpop.f32.mrb[0].mxu0
        %v857 = vadd.f32 0.0, %v856
        %858 = vmatprep.mubr.bf16.mxu0 0
        %859 = vmatmul.mubr.bf16.gmra.mrb[0].mxu0 %v430
        %v860 = vpop.f32.mrb[0].mxu0
        %v861 = vadd.f32 0.0, %v860
        %v862 = vpop.f32.mrb[0].mxu0
        %v863 = vadd.f32 0.0, %v862
        %v864 = vpop.f32.mrb[0].mxu0
        %v865 = vadd.f32 0.0, %v864
        %v866 = vpop.f32.mrb[0].mxu0
        %v867 = vadd.f32 0.0, %v866
        %868 = vmatprep.mubr.bf16.mxu0 0
        %869 = vmatmul.mubr.bf16.gmra.mrb[0].mxu0 %v431
        %v870 = vpop.f32.mrb[0].mxu0
        %v871 = vadd.f32 0.0, %v870
        %v872 = vpop.f32.mrb[0].mxu0
        %v873 = vadd.f32 0.0, %v872
        %v874 = vpop.f32.mrb[0].mxu0
        %v875 = vadd.f32 0.0, %v874
        %v876 = vpop.f32.mrb[0].mxu0
        %v877 = vadd.f32 0.0, %v876
        %878 = vmatprep.mubr.bf16.mxu0 0
        %879 = vmatmul.mubr.bf16.gmra.mrb[0].mxu0 %v432
        %v880 = vpop.f32.mrb[0].mxu0
        %v881 = vadd.f32 0.0, %v880
        %v882 = vpop.f32.mrb[0].mxu0
        %v883 = vadd.f32 0.0, %v882
        %v884 = vpop.f32.mrb[0].mxu0
        %v885 = vadd.f32 0.0, %v884
        %v886 = vpop.f32.mrb[0].mxu0
        %v887 = vadd.f32 0.0, %v886
        %888 = vmatprep.mubr.bf16.mxu0 0
        %889 = vmatmul.mubr.bf16.gmra.mrb[0].mxu0 %v433
        %v890 = vpop.f32.mrb[0].mxu0
        %v891 = vadd.f32 0.0, %v890
        %v892 = vpop.f32.mrb[0].mxu0
        %v893 = vadd.f32 0.0, %v892
        %v894 = vpop.f32.mrb[0].mxu0
        %v895 = vadd.f32 0.0, %v894
        %v896 = vpop.f32.mrb[0].mxu0
        %v897 = vadd.f32 0.0, %v896
        %898 = vdwg.mxu0
        %v899 = vmul.f32 %v581, %v583
        %v900 = vmul.f32 %v585, %v587
        %v901 = vmul.f32 %v591, %v593
        %v902 = vmul.f32 %v595, %v597
        %v903 = vmul.f32 %v601, %v603
        %v904 = vmul.f32 %v605, %v607
        %v905 = vmul.f32 %v611, %v613
        %v906 = vmul.f32 %v615, %v617
        %v907 = vmul.f32 %v621, %v623
        %v908 = vmul.f32 %v625, %v627
        %v909 = vmul.f32 %v631, %v633
        %v910 = vmul.f32 %v635, %v637
        %v911 = vmul.f32 %v641, %v643
        %v912 = vmul.f32 %v645, %v647
        %v913 = vmul.f32 %v651, %v653
        %v914 = vmul.f32 %v655, %v657
        %v915 = vmul.f32 %v661, %v663
        %v916 = vmul.f32 %v665, %v667
        %v917 = vmul.f32 %v671, %v673
        %v918 = vmul.f32 %v675, %v677
        %v919 = vmul.f32 %v681, %v683
        %v920 = vmul.f32 %v685, %v687
        %v921 = vmul.f32 %v691, %v693
        %v922 = vmul.f32 %v695, %v697
        %v923 = vmul.f32 %v701, %v703
        %v924 = vmul.f32 %v705, %v707
        %v925 = vmul.f32 %v711, %v713
        %v926 = vmul.f32 %v715, %v717
        %v927 = vmul.f32 %v721, %v723
        %v928 = vmul.f32 %v725, %v727
        %v929 = vmul.f32 %v731, %v733
        %v930 = vmul.f32 %v735, %v737
        %v931 = vmul.f32 %v741, %v743
        %v932 = vmul.f32 %v745, %v747
        %v933 = vmul.f32 %v751, %v753
        %v934 = vmul.f32 %v755, %v757
        %v935 = vmul.f32 %v761, %v763
        %v936 = vmul.f32 %v765, %v767
        %v937 = vmul.f32 %v771, %v773
        %v938 = vmul.f32 %v775, %v777
        %v939 = vmul.f32 %v781, %v783
        %v940 = vmul.f32 %v785, %v787
        %v941 = vmul.f32 %v791, %v793
        %v942 = vmul.f32 %v795, %v797
        %v943 = vmul.f32 %v801, %v803
        %v944 = vmul.f32 %v805, %v807
        %v945 = vmul.f32 %v811, %v813
        %v946 = vmul.f32 %v815, %v817
        %v947 = vmul.f32 %v821, %v823
        %v948 = vmul.f32 %v825, %v827
        %v949 = vmul.f32 %v831, %v833
        %v950 = vmul.f32 %v835, %v837
        %v951 = vmul.f32 %v841, %v843
        %v952 = vmul.f32 %v845, %v847
        %v953 = vmul.f32 %v851, %v853
        %v954 = vmul.f32 %v855, %v857
        %v955 = vmul.f32 %v861, %v863
        %v956 = vmul.f32 %v865, %v867
        %v957 = vmul.f32 %v871, %v873
        %v958 = vmul.f32 %v875, %v877
        %v959 = vmul.f32 %v881, %v883
        %v960 = vmul.f32 %v885, %v887
        %v961 = vmul.f32 %v891, %v893
        %v962 = vmul.f32 %v895, %v897
        %v963 = vsub.f32 1.0, %v899
        %v964 = vsub.f32 1.0, %v900
        %v965 = vsub.f32 1.0, %v901
        %v966 = vsub.f32 1.0, %v902
        %v967 = vsub.f32 1.0, %v903
        %v968 = vsub.f32 1.0, %v904
        %v969 = vsub.f32 1.0, %v905
        %v970 = vsub.f32 1.0, %v906
        %v971 = vsub.f32 1.0, %v907
        %v972 = vsub.f32 1.0, %v908
        %v973 = vsub.f32 1.0, %v909
        %v974 = vsub.f32 1.0, %v910
        %v975 = vsub.f32 1.0, %v911
        %v976 = vsub.f32 1.0, %v912
        %v977 = vsub.f32 1.0, %v913
        %v978 = vsub.f32 1.0, %v914
        %v979 = vsub.f32 1.0, %v915
        %v980 = vsub.f32 1.0, %v916
        %v981 = vsub.f32 1.0, %v917
        %v982 = vsub.f32 1.0, %v918
        %v983 = vsub.f32 1.0, %v919
        %v984 = vsub.f32 1.0, %v920
        %v985 = vsub.f32 1.0, %v921
        %v986 = vsub.f32 1.0, %v922
        %v987 = vsub.f32 1.0, %v923
        %v988 = vsub.f32 1.0, %v924
        %v989 = vsub.f32 1.0, %v925
        %v990 = vsub.f32 1.0, %v926
        %v991 = vsub.f32 1.0, %v927
        %v992 = vsub.f32 1.0, %v928
        %v993 = vsub.f32 1.0, %v929
        %v994 = vsub.f32 1.0, %v930
        %v995 = vsub.f32 1.0, %v931
        %v996 = vsub.f32 1.0, %v932
        %v997 = vsub.f32 1.0, %v933
        %v998 = vsub.f32 1.0, %v934
        %v999 = vsub.f32 1.0, %v935
        %v1000 = vsub.f32 1.0, %v936
        %v1001 = vsub.f32 1.0, %v937
        %v1002 = vsub.f32 1.0, %v938
        %v1003 = vsub.f32 1.0, %v939
        %v1004 = vsub.f32 1.0, %v940
        %v1005 = vsub.f32 1.0, %v941
        %v1006 = vsub.f32 1.0, %v942
        %v1007 = vsub.f32 1.0, %v943
        %v1008 = vsub.f32 1.0, %v944
        %v1009 = vsub.f32 1.0, %v945
        %v1010 = vsub.f32 1.0, %v946
        %v1011 = vsub.f32 1.0, %v947
        %v1012 = vsub.f32 1.0, %v948
        %v1013 = vsub.f32 1.0, %v949
        %v1014 = vsub.f32 1.0, %v950
        %v1015 = vsub.f32 1.0, %v951
        %v1016 = vsub.f32 1.0, %v952
        %v1017 = vsub.f32 1.0, %v953
        %v1018 = vsub.f32 1.0, %v954
        %v1019 = vsub.f32 1.0, %v955
        %v1020 = vsub.f32 1.0, %v956
        %v1021 = vsub.f32 1.0, %v957
        %v1022 = vsub.f32 1.0, %v958
        %v1023 = vsub.f32 1.0, %v959
        %v1024 = vsub.f32 1.0, %v960
        %v1025 = vsub.f32 1.0, %v961
        %v1026 = vsub.f32 1.0, %v962
        %v1027 = vunpack.c.l.bf16 %v194
        %v1028 = vunpack.c.l.bf16 %v195
        %v1029 = vunpack.c.l.bf16 %v196
        %v1030 = vunpack.c.l.bf16 %v197
        %v1031 = vunpack.c.l.bf16 %v198
        %v1032 = vunpack.c.l.bf16 %v199
        %v1033 = vunpack.c.l.bf16 %v200
        %v1034 = vunpack.c.l.bf16 %v201
        %v1035 = vunpack.c.l.bf16 %v202
        %v1036 = vunpack.c.l.bf16 %v203
        %v1037 = vunpack.c.l.bf16 %v204
        %v1038 = vunpack.c.l.bf16 %v205
        %v1039 = vunpack.c.l.bf16 %v206
        %v1040 = vunpack.c.l.bf16 %v207
        %v1041 = vunpack.c.l.bf16 %v208
        %v1042 = vunpack.c.l.bf16 %v209
        %v1043 = vunpack.c.l.bf16 %v210
        %v1044 = vunpack.c.l.bf16 %v211
        %v1045 = vunpack.c.l.bf16 %v212
        %v1046 = vunpack.c.l.bf16 %v213
        %v1047 = vunpack.c.l.bf16 %v214
        %v1048 = vunpack.c.l.bf16 %v215
        %v1049 = vunpack.c.l.bf16 %v216
        %v1050 = vunpack.c.l.bf16 %v217
        %v1051 = vunpack.c.l.bf16 %v218
        %v1052 = vunpack.c.l.bf16 %v219
        %v1053 = vunpack.c.l.bf16 %v220
        %v1054 = vunpack.c.l.bf16 %v221
        %v1055 = vunpack.c.l.bf16 %v222
        %v1056 = vunpack.c.l.bf16 %v223
        %v1057 = vunpack.c.l.bf16 %v224
        %v1058 = vunpack.c.l.bf16 %v225
        %v1059 = vunpack.c.l.bf16 %v226
        %v1060 = vunpack.c.l.bf16 %v227
        %v1061 = vunpack.c.l.bf16 %v228
        %v1062 = vunpack.c.l.bf16 %v229
        %v1063 = vunpack.c.l.bf16 %v230
        %v1064 = vunpack.c.l.bf16 %v231
        %v1065 = vunpack.c.l.bf16 %v232
        %v1066 = vunpack.c.l.bf16 %v233
        %v1067 = vunpack.c.l.bf16 %v234
        %v1068 = vunpack.c.l.bf16 %v235
        %v1069 = vunpack.c.l.bf16 %v236
        %v1070 = vunpack.c.l.bf16 %v237
        %v1071 = vunpack.c.l.bf16 %v238
        %v1072 = vunpack.c.l.bf16 %v239
        %v1073 = vunpack.c.l.bf16 %v240
        %v1074 = vunpack.c.l.bf16 %v241
        %v1075 = vunpack.c.l.bf16 %v242
        %v1076 = vunpack.c.l.bf16 %v243
        %v1077 = vunpack.c.l.bf16 %v244
        %v1078 = vunpack.c.l.bf16 %v245
        %v1079 = vunpack.c.l.bf16 %v246
        %v1080 = vunpack.c.l.bf16 %v247
        %v1081 = vunpack.c.l.bf16 %v248
        %v1082 = vunpack.c.l.bf16 %v249
        %v1083 = vunpack.c.l.bf16 %v250
        %v1084 = vunpack.c.l.bf16 %v251
        %v1085 = vunpack.c.l.bf16 %v252
        %v1086 = vunpack.c.l.bf16 %v253
        %v1087 = vunpack.c.l.bf16 %v254
        %v1088 = vunpack.c.l.bf16 %v255
        %v1089 = vunpack.c.l.bf16 %v256
        %v1090 = vunpack.c.l.bf16 %v257
        %v1091 = vadd.f32 %v963, %v1027
        %v1092 = vadd.f32 %v964, %v1028
        %v1093 = vadd.f32 %v965, %v1029
        %v1094 = vadd.f32 %v966, %v1030
        %v1095 = vadd.f32 %v967, %v1031
        %v1096 = vadd.f32 %v968, %v1032
        %v1097 = vadd.f32 %v969, %v1033
        %v1098 = vadd.f32 %v970, %v1034
        %v1099 = vadd.f32 %v971, %v1035
        %v1100 = vadd.f32 %v972, %v1036
        %v1101 = vadd.f32 %v973, %v1037
        %v1102 = vadd.f32 %v974, %v1038
        %v1103 = vadd.f32 %v975, %v1039
        %v1104 = vadd.f32 %v976, %v1040
        %v1105 = vadd.f32 %v977, %v1041
        %v1106 = vadd.f32 %v978, %v1042
        %v1107 = vadd.f32 %v979, %v1043
        %v1108 = vadd.f32 %v980, %v1044
        %v1109 = vadd.f32 %v981, %v1045
        %v1110 = vadd.f32 %v982, %v1046
        %v1111 = vadd.f32 %v983, %v1047
        %v1112 = vadd.f32 %v984, %v1048
        %v1113 = vadd.f32 %v985, %v1049
        %v1114 = vadd.f32 %v986, %v1050
        %v1115 = vadd.f32 %v987, %v1051
        %v1116 = vadd.f32 %v988, %v1052
        %v1117 = vadd.f32 %v989, %v1053
        %v1118 = vadd.f32 %v990, %v1054
        %v1119 = vadd.f32 %v991, %v1055
        %v1120 = vadd.f32 %v992, %v1056
        %v1121 = vadd.f32 %v993, %v1057
        %v1122 = vadd.f32 %v994, %v1058
        %v1123 = vadd.f32 %v995, %v1059
        %v1124 = vadd.f32 %v996, %v1060
        %v1125 = vadd.f32 %v997, %v1061
        %v1126 = vadd.f32 %v998, %v1062
        %v1127 = vadd.f32 %v999, %v1063
        %v1128 = vadd.f32 %v1000, %v1064
        %v1129 = vadd.f32 %v1001, %v1065
        %v1130 = vadd.f32 %v1002, %v1066
        %v1131 = vadd.f32 %v1003, %v1067
        %v1132 = vadd.f32 %v1004, %v1068
        %v1133 = vadd.f32 %v1005, %v1069
        %v1134 = vadd.f32 %v1006, %v1070
        %v1135 = vadd.f32 %v1007, %v1071
        %v1136 = vadd.f32 %v1008, %v1072
        %v1137 = vadd.f32 %v1009, %v1073
        %v1138 = vadd.f32 %v1010, %v1074
        %v1139 = vadd.f32 %v1011, %v1075
        %v1140 = vadd.f32 %v1012, %v1076
        %v1141 = vadd.f32 %v1013, %v1077
        %v1142 = vadd.f32 %v1014, %v1078
        %v1143 = vadd.f32 %v1015, %v1079
        %v1144 = vadd.f32 %v1016, %v1080
        %v1145 = vadd.f32 %v1017, %v1081
        %v1146 = vadd.f32 %v1018, %v1082
        %v1147 = vadd.f32 %v1019, %v1083
        %v1148 = vadd.f32 %v1020, %v1084
        %v1149 = vadd.f32 %v1021, %v1085
        %v1150 = vadd.f32 %v1022, %v1086
        %v1151 = vadd.f32 %v1023, %v1087
        %v1152 = vadd.f32 %v1024, %v1088
        %v1153 = vadd.f32 %v1025, %v1089
        %v1154 = vadd.f32 %v1026, %v1090
        %v1155 = vpack.c.bf16 %v1092, %v1091
        %v1156 = vpack.c.bf16 %v1094, %v1093
        %v1157 = vpack.c.bf16 %v1096, %v1095
        %v1158 = vpack.c.bf16 %v1098, %v1097
        %v1159 = vpack.c.bf16 %v1100, %v1099
        %v1160 = vpack.c.bf16 %v1102, %v1101
        %v1161 = vpack.c.bf16 %v1104, %v1103
        %v1162 = vpack.c.bf16 %v1106, %v1105
        %v1163 = vpack.c.bf16 %v1108, %v1107
        %v1164 = vpack.c.bf16 %v1110, %v1109
        %v1165 = vpack.c.bf16 %v1112, %v1111
        %v1166 = vpack.c.bf16 %v1114, %v1113
        %v1167 = vpack.c.bf16 %v1116, %v1115
        %v1168 = vpack.c.bf16 %v1118, %v1117
        %v1169 = vpack.c.bf16 %v1120, %v1119
        %v1170 = vpack.c.bf16 %v1122, %v1121
        %v1171 = vpack.c.bf16 %v1124, %v1123
        %v1172 = vpack.c.bf16 %v1126, %v1125
        %v1173 = vpack.c.bf16 %v1128, %v1127
        %v1174 = vpack.c.bf16 %v1130, %v1129
        %v1175 = vpack.c.bf16 %v1132, %v1131
        %v1176 = vpack.c.bf16 %v1134, %v1133
        %v1177 = vpack.c.bf16 %v1136, %v1135
        %v1178 = vpack.c.bf16 %v1138, %v1137
        %v1179 = vpack.c.bf16 %v1140, %v1139
        %v1180 = vpack.c.bf16 %v1142, %v1141
        %v1181 = vpack.c.bf16 %v1144, %v1143
        %v1182 = vpack.c.bf16 %v1146, %v1145
        %v1183 = vpack.c.bf16 %v1148, %v1147
        %v1184 = vpack.c.bf16 %v1150, %v1149
        %v1185 = vpack.c.bf16 %v1152, %v1151
        %v1186 = vpack.c.bf16 %v1154, %v1153
        %v1219 = vunpack.c.l.b16 %v1155
        %v1220 = vunpack.c.h.b16 %v1155
        %v1221 = vunpack.c.l.b16 %v1156
        %v1222 = vunpack.c.h.b16 %v1156
        %v1223 = vunpack.c.l.b16 %v1157
        %v1224 = vunpack.c.h.b16 %v1157
        %v1225 = vunpack.c.l.b16 %v1158
        %v1226 = vunpack.c.h.b16 %v1158
        %v1227 = vunpack.c.l.b16 %v1159
        %v1228 = vunpack.c.h.b16 %v1159
        %v1229 = vunpack.c.l.b16 %v1160
        %v1230 = vunpack.c.h.b16 %v1160
        %v1231 = vunpack.c.l.b16 %v1161
        %v1232 = vunpack.c.h.b16 %v1161
        %v1233 = vunpack.c.l.b16 %v1162
        %v1234 = vunpack.c.h.b16 %v1162
        %v1235 = vunpack.c.l.b16 %v1163
        %v1236 = vunpack.c.h.b16 %v1163
        %v1237 = vunpack.c.l.b16 %v1164
        %v1238 = vunpack.c.h.b16 %v1164
        %v1239 = vunpack.c.l.b16 %v1165
        %v1240 = vunpack.c.h.b16 %v1165
        %v1241 = vunpack.c.l.b16 %v1166
        %v1242 = vunpack.c.h.b16 %v1166
        %v1243 = vunpack.c.l.b16 %v1167
        %v1244 = vunpack.c.h.b16 %v1167
        %v1245 = vunpack.c.l.b16 %v1168
        %v1246 = vunpack.c.h.b16 %v1168
        %v1247 = vunpack.c.l.b16 %v1169
        %v1248 = vunpack.c.h.b16 %v1169
        %v1249 = vunpack.c.l.b16 %v1170
        %v1250 = vunpack.c.h.b16 %v1170
        %v1251 = vunpack.c.l.b16 %v1171
        %v1252 = vunpack.c.h.b16 %v1171
        %v1253 = vunpack.c.l.b16 %v1172
        %v1254 = vunpack.c.h.b16 %v1172
        %v1255 = vunpack.c.l.b16 %v1173
        %v1256 = vunpack.c.h.b16 %v1173
        %v1257 = vunpack.c.l.b16 %v1174
        %v1258 = vunpack.c.h.b16 %v1174
        %v1259 = vunpack.c.l.b16 %v1175
        %v1260 = vunpack.c.h.b16 %v1175
        %v1261 = vunpack.c.l.b16 %v1176
        %v1262 = vunpack.c.h.b16 %v1176
        %v1263 = vunpack.c.l.b16 %v1177
        %v1264 = vunpack.c.h.b16 %v1177
        %v1265 = vunpack.c.l.b16 %v1178
        %v1266 = vunpack.c.h.b16 %v1178
        %v1267 = vunpack.c.l.b16 %v1179
        %v1268 = vunpack.c.h.b16 %v1179
        %v1269 = vunpack.c.l.b16 %v1180
        %v1270 = vunpack.c.h.b16 %v1180
        %v1271 = vunpack.c.l.b16 %v1181
        %v1272 = vunpack.c.h.b16 %v1181
        %v1273 = vunpack.c.l.b16 %v1182
        %v1274 = vunpack.c.h.b16 %v1182
        %v1275 = vunpack.c.l.b16 %v1183
        %v1276 = vunpack.c.h.b16 %v1183
        %v1277 = vunpack.c.l.b16 %v1184
        %v1278 = vunpack.c.h.b16 %v1184
        %v1279 = vunpack.c.l.b16 %v1185
        %v1280 = vunpack.c.h.b16 %v1185
        %v1281 = vunpack.c.l.b16 %v1186
        %v1282 = vunpack.c.h.b16 %v1186
        %v1283 = vpack.c.b16 %v1219, %v1219
        %v1284 = vpack.c.b16 %v1220, %v1220
        %v1285 = vpack.c.b16 %v1221, %v1221
        %v1286 = vpack.c.b16 %v1222, %v1222
        %v1287 = vpack.c.b16 %v1223, %v1223
        %v1288 = vpack.c.b16 %v1224, %v1224
        %v1289 = vpack.c.b16 %v1225, %v1225
        %v1290 = vpack.c.b16 %v1226, %v1226
        %v1291 = vpack.c.b16 %v1227, %v1227
        %v1292 = vpack.c.b16 %v1228, %v1228
        %v1293 = vpack.c.b16 %v1229, %v1229
        %v1294 = vpack.c.b16 %v1230, %v1230
        %v1295 = vpack.c.b16 %v1231, %v1231
        %v1296 = vpack.c.b16 %v1232, %v1232
        %v1297 = vpack.c.b16 %v1233, %v1233
        %v1298 = vpack.c.b16 %v1234, %v1234
        %v1299 = vpack.c.b16 %v1235, %v1235
        %v1300 = vpack.c.b16 %v1236, %v1236
        %v1301 = vpack.c.b16 %v1237, %v1237
        %v1302 = vpack.c.b16 %v1238, %v1238
        %v1303 = vpack.c.b16 %v1239, %v1239
        %v1304 = vpack.c.b16 %v1240, %v1240
        %v1305 = vpack.c.b16 %v1241, %v1241
        %v1306 = vpack.c.b16 %v1242, %v1242
        %v1307 = vpack.c.b16 %v1243, %v1243
        %v1308 = vpack.c.b16 %v1244, %v1244
        %v1309 = vpack.c.b16 %v1245, %v1245
        %v1310 = vpack.c.b16 %v1246, %v1246
        %v1311 = vpack.c.b16 %v1247, %v1247
        %v1312 = vpack.c.b16 %v1248, %v1248
        %v1313 = vpack.c.b16 %v1249, %v1249
        %v1314 = vpack.c.b16 %v1250, %v1250
        %v1315 = vpack.c.b16 %v1251, %v1251
        %v1316 = vpack.c.b16 %v1252, %v1252
        %v1317 = vpack.c.b16 %v1253, %v1253
        %v1318 = vpack.c.b16 %v1254, %v1254
        %v1319 = vpack.c.b16 %v1255, %v1255
        %v1320 = vpack.c.b16 %v1256, %v1256
        %v1321 = vpack.c.b16 %v1257, %v1257
        %v1322 = vpack.c.b16 %v1258, %v1258
        %v1323 = vpack.c.b16 %v1259, %v1259
        %v1324 = vpack.c.b16 %v1260, %v1260
        %v1325 = vpack.c.b16 %v1261, %v1261
        %v1326 = vpack.c.b16 %v1262, %v1262
        %v1327 = vpack.c.b16 %v1263, %v1263
        %v1328 = vpack.c.b16 %v1264, %v1264
        %v1329 = vpack.c.b16 %v1265, %v1265
        %v1330 = vpack.c.b16 %v1266, %v1266
        %v1331 = vpack.c.b16 %v1267, %v1267
        %v1332 = vpack.c.b16 %v1268, %v1268
        %v1333 = vpack.c.b16 %v1269, %v1269
        %v1334 = vpack.c.b16 %v1270, %v1270
        %v1335 = vpack.c.b16 %v1271, %v1271
        %v1336 = vpack.c.b16 %v1272, %v1272
        %v1337 = vpack.c.b16 %v1273, %v1273
        %v1338 = vpack.c.b16 %v1274, %v1274
        %v1339 = vpack.c.b16 %v1275, %v1275
        %v1340 = vpack.c.b16 %v1276, %v1276
        %v1341 = vpack.c.b16 %v1277, %v1277
        %v1342 = vpack.c.b16 %v1278, %v1278
        %v1343 = vpack.c.b16 %v1279, %v1279
        %v1344 = vpack.c.b16 %v1280, %v1280
        %v1345 = vpack.c.b16 %v1281, %v1281
        %v1346 = vpack.c.b16 %v1282, %v1282
        %1411 = vst [vmem:[%s182] sm:$0xf] %v1283
        %1412 = vst [vmem:[%s182 + $0x4] sm:$0xf] %v1284
        %1413 = vst [vmem:[%s182 + $0x8] sm:$0xf] %v1285
        %1414 = vst [vmem:[%s182 + $0xc] sm:$0xf] %v1286
        %1415 = vst [vmem:[%s182 + $0x10] sm:$0xf] %v1287
        %1416 = vst [vmem:[%s182 + $0x14] sm:$0xf] %v1288
        %1417 = vst [vmem:[%s182 + $0x18] sm:$0xf] %v1289
        %1418 = vst [vmem:[%s182 + $0x1c] sm:$0xf] %v1290
        %1419 = vst [vmem:[%s182 + $0x20] sm:$0xf] %v1291
        %1420 = vst [vmem:[%s182 + $0x24] sm:$0xf] %v1292
        %1421 = vst [vmem:[%s182 + $0x28] sm:$0xf] %v1293
        %1422 = vst [vmem:[%s182 + $0x2c] sm:$0xf] %v1294
        %1423 = vst [vmem:[%s182 + $0x30] sm:$0xf] %v1295
        %1424 = vst [vmem:[%s182 + $0x34] sm:$0xf] %v1296
        %1425 = vst [vmem:[%s182 + $0x38] sm:$0xf] %v1297
        %1426 = vst [vmem:[%s182 + $0x3c] sm:$0xf] %v1298
        %1427 = vst [vmem:[%s182 + $0x40] sm:$0xf] %v1299
        %1428 = vst [vmem:[%s182 + $0x44] sm:$0xf] %v1300
        %1429 = vst [vmem:[%s182 + $0x48] sm:$0xf] %v1301
        %1430 = vst [vmem:[%s182 + $0x4c] sm:$0xf] %v1302
        %1431 = vst [vmem:[%s182 + $0x50] sm:$0xf] %v1303
        %1432 = vst [vmem:[%s182 + $0x54] sm:$0xf] %v1304
        %1433 = vst [vmem:[%s182 + $0x58] sm:$0xf] %v1305
        %1434 = vst [vmem:[%s182 + $0x5c] sm:$0xf] %v1306
        %1435 = vst [vmem:[%s182 + $0x60] sm:$0xf] %v1307
        %1436 = vst [vmem:[%s182 + $0x64] sm:$0xf] %v1308
        %1437 = vst [vmem:[%s182 + $0x68] sm:$0xf] %v1309
        %1438 = vst [vmem:[%s182 + $0x6c] sm:$0xf] %v1310
        %1439 = vst [vmem:[%s182 + $0x70] sm:$0xf] %v1311
        %1440 = vst [vmem:[%s182 + $0x74] sm:$0xf] %v1312
        %1441 = vst [vmem:[%s182 + $0x78] sm:$0xf] %v1313
        %1442 = vst [vmem:[%s182 + $0x7c] sm:$0xf] %v1314
        %1443 = vst [vmem:[%s182 + $0x80] sm:$0xf] %v1315
        %1444 = vst [vmem:[%s182 + $0x84] sm:$0xf] %v1316
        %1445 = vst [vmem:[%s182 + $0x88] sm:$0xf] %v1317
        %1446 = vst [vmem:[%s182 + $0x8c] sm:$0xf] %v1318
        %1447 = vst [vmem:[%s182 + $0x90] sm:$0xf] %v1319
        %1448 = vst [vmem:[%s182 + $0x94] sm:$0xf] %v1320
        %1449 = vst [vmem:[%s182 + $0x98] sm:$0xf] %v1321
        %1450 = vst [vmem:[%s182 + $0x9c] sm:$0xf] %v1322
        %1451 = vst [vmem:[%s182 + $0xa0] sm:$0xf] %v1323
        %1452 = vst [vmem:[%s182 + $0xa4] sm:$0xf] %v1324
        %1453 = vst [vmem:[%s182 + $0xa8] sm:$0xf] %v1325
        %1454 = vst [vmem:[%s182 + $0xac] sm:$0xf] %v1326
        %1455 = vst [vmem:[%s182 + $0xb0] sm:$0xf] %v1327
        %1456 = vst [vmem:[%s182 + $0xb4] sm:$0xf] %v1328
        %1457 = vst [vmem:[%s182 + $0xb8] sm:$0xf] %v1329
        %1458 = vst [vmem:[%s182 + $0xbc] sm:$0xf] %v1330
        %1459 = vst [vmem:[%s182 + $0xc0] sm:$0xf] %v1331
        %1460 = vst [vmem:[%s182 + $0xc4] sm:$0xf] %v1332
        %1461 = vst [vmem:[%s182 + $0xc8] sm:$0xf] %v1333
        %1462 = vst [vmem:[%s182 + $0xcc] sm:$0xf] %v1334
        %1463 = vst [vmem:[%s182 + $0xd0] sm:$0xf] %v1335
        %1464 = vst [vmem:[%s182 + $0xd4] sm:$0xf] %v1336
        %1465 = vst [vmem:[%s182 + $0xd8] sm:$0xf] %v1337
        %1466 = vst [vmem:[%s182 + $0xdc] sm:$0xf] %v1338
        %1467 = vst [vmem:[%s182 + $0xe0] sm:$0xf] %v1339
        %1468 = vst [vmem:[%s182 + $0xe4] sm:$0xf] %v1340
        %1469 = vst [vmem:[%s182 + $0xe8] sm:$0xf] %v1341
        %1470 = vst [vmem:[%s182 + $0xec] sm:$0xf] %v1342
        %1471 = vst [vmem:[%s182 + $0xf0] sm:$0xf] %v1343
        %1472 = vst [vmem:[%s182 + $0xf4] sm:$0xf] %v1344
        %1473 = vst [vmem:[%s182 + $0xf8] sm:$0xf] %v1345
        %1474 = vst [vmem:[%s182 + $0xfc] sm:$0xf] %v1346
        %s1475 = sand.u32 %s75, 1
        %s1476 = scalar_lea.sflag [#allocation4], %s1475
        %s1477 = sand.u32 %s75, 1
        %s1478 = smul.addr %s1477, 256
        %s1479 = scalar_lea.vmem [#allocation7], %s1478
        // Predicated region
        $region37: #{tpu_custom_call.1} parent=27 // pred_check
          %p1480 = pneg %p85
        $region38: #{tpu_custom_call.1} parent=27 // pred_check_branch
          %1482 = sbr.rel (%p1480) target = $region40
        $region39: #{tpu_custom_call.1} parent=27 // pred_region
          %s1483 = smul.u32 64, %s20
          %s1484 = ssub.s32 160, %s1483
          %p1485 = scmp.lt.s32.totalorder %s1484, 64
          %s1486 = scalar_select %p1485, %s1484, 64
          %s1487 = smul.u32 64, %s1486
          %s1489 = ssub.s32 4096, %s1487
          %1490 = vsyncadd %s1476, %s1489
          %p1491 = scmp.ne.s32.totalorder 0, %s1487
          %s1492 = smul.addr %s1483, 64
          %s1493 = scalar_lea.hbm %s2, %s1492
          %s1494 = smul.u32 4, %s1486
          %s1495 = sshll.u32 %s1479, 4
          %s1496 = int_to_ptr.vmem [resolvable:$true] %s1495
          %s1497 = sshll.u32 %s1494, 4
          %1501 = dma.vmem_to_hbm [thread:$0]  (%p1491), %s1496, %s1497, %s1493, %s1476, 64, 64, 4
        $region40: #{tpu_custom_call.1} parent=27 // pred_fallthru
          _
      $region28: #{tpu_custom_call.1} parent=5 // pred_fallthru
        _
      %p1502 = scmp.le.s32.totalorder 2, %s15
      // Predicated region
      $region41: #{tpu_custom_call.1} parent=5 // pred_check
        %p1503 = pneg %p1502
      $region42: #{tpu_custom_call.1} parent=5 // pred_check_branch
        %1505 = sbr.rel (%p1503) target = $region44
      $region43: #{tpu_custom_call.1} parent=5 // pred_region
        %s1506 = ssub.s32 %s15, 2
        // Predicated region
        $region45: #{tpu_custom_call.1} parent=43 // pred_check
          %p1507 = pneg %p91
        $region46: #{tpu_custom_call.1} parent=43 // pred_check_branch
          %1509 = sbr.rel (%p1507) target = $region48
        $region47: #{tpu_custom_call.1} parent=43 // pred_region
          %s1510 = sand.u32 %s76, 1
          %s1511 = scalar_lea.sflag [#allocation4], %s1510
          %s1512 = sand.u32 %s76, 1
          %s1513 = smul.addr %s1512, 256
          %s1514 = scalar_lea.vmem [#allocation7], %s1513
          %1515 = dma.done %s1511, 4096
        $region48: #{tpu_custom_call.1} parent=43 // pred_fallthru
          _
      $region44: #{tpu_custom_call.1} parent=5 // pred_fallthru
        _
    $region6: #{tpu_custom_call.1} parent=1 // loop_footer
      %s19 = sadd.s32 1, %s15
    $region7: #{tpu_custom_call.1} parent=1 // loop_footer_branch
      %14 = sbr.rel target = $region3
    $region8: #{tpu_custom_call.1} parent=1 // loop_exit
      _
    %1516 = vsyncpa [#allocation3], 1
    %s1517 = scalar_lea.sflag [#allocation3], 1
    %1518 = vsyncpa %s1517, 1
    %1519 = vsyncpa [#allocation6], 1
    %1520 = vsyncpa [#allocation4], 1
    %s1521 = scalar_lea.sflag [#allocation4], 1
    %1522 = vsyncpa %s1521, 1

</llo_original>
